<compile_context>
chip_gen: v5e
topology: v5e:2x2
jax: 0.10.0
libtpu: 0.0.40
codegen_flags: <defaults>
</compile_context>

<pallas_src>
import functools
import math

import jax
import jax.numpy as jnp
import numpy as np
from jax.experimental import pallas as pl
from jax.experimental.pallas import tpu as pltpu


def _mha_head_kernel(q_ref, k_ref, v_ref,
                     wq_ref, bq_ref, wk_ref, bk_ref, wv_ref, bv_ref,
                     wo_ref, bo_ref,
                     o_ref, acc_ref,
                     *, bt, s, h, d_k, scale):
    """One grid step = (batch-tile b, head j)."""
    head = pl.program_id(1)
    D = h * d_k
    M = bt * s

    @pl.when(head == 0)
    def _init():
        acc_ref[...] = jnp.zeros_like(acc_ref)

    # Flatten the batch tile so the projection GEMMs see M = bt*s rows.
    xq = q_ref[...].reshape(M, D)
    xk = k_ref[...].reshape(M, D)
    xv = v_ref[...].reshape(M, D)
    in_dtype = xq.dtype

    wq = wq_ref[0]                          # (D, d_k)
    wk = wk_ref[0]
    wv = wv_ref[0]
    wo = wo_ref[0]                          # (d_k, D)

    # Per-head projections: full-D contraction, f32 accumulation on the MXU.
    qh = jnp.dot(xq, wq, preferred_element_type=jnp.float32) + bq_ref[0]
    kh = jnp.dot(xk, wk, preferred_element_type=jnp.float32) + bk_ref[0]
    vh = jnp.dot(xv, wv, preferred_element_type=jnp.float32) + bv_ref[0]

    # Fold 1/sqrt(d_k) into Q: O(M*d_k) VPU work instead of O(S*S) on scores.
    qh = qh * scale

    # Feed attention matmuls in the activation dtype (bf16 stays bf16 on v6e/v7x);
    # softmax intermediates stay f32 (v5e has no bf16 VPU/EUP).
    qh3 = qh.astype(in_dtype).reshape(bt, s, d_k)
    kh3 = kh.astype(in_dtype).reshape(bt, s, d_k)
    vh3 = vh.astype(in_dtype).reshape(bt, s, d_k)

    scores = jnp.einsum('bqd,bkd->bqk', qh3, kh3,
                        preferred_element_type=jnp.float32)        # (bt, s, s) f32
    m = jnp.max(scores, axis=-1, keepdims=True)
    e = jnp.exp(scores - m)
    denom = jnp.sum(e, axis=-1, keepdims=True)
    p = e * pl.reciprocal(denom, approx=True)                      # divide -> EUP slot

    ctx = jnp.einsum('bqk,bkd->bqd', p.astype(in_dtype), vh3,
                     preferred_element_type=jnp.float32)           # (bt, s, d_k)
    ctx2d = ctx.reshape(M, d_k).astype(in_dtype)

    # This head's slice of the output projection, accumulated across heads.
    acc_ref[...] += jnp.dot(ctx2d, wo, preferred_element_type=jnp.float32)

    @pl.when(head == h - 1)
    def _finalize():
        out = acc_ref[...] + bo_ref[...]
        o_ref[...] = out.reshape(bt, s, D).astype(o_ref.dtype)


def _pick_batch_tile(B, S, D, d_k, itemsize):
    """Biggest batch tile that targets >=256 GEMM rows per grid step while keeping the
    per-step working set comfortably under the default scoped-VMEM budget (v7x-safe)."""
    per_b = (3 * S * D * itemsize * 2      # q/k/v activation blocks (double-buffered)
             + 2 * S * D * itemsize        # output block (double-buffered)
             + 3 * S * d_k * 4             # per-head Q/K/V f32 intermediates
             + 2 * S * S * 4               # scores + probabilities (f32)
             + S * D * 4)                  # output-projection accumulator
    budget = 24 * 1024 * 1024
    cap = max(1, budget // max(per_b, 1))
    target = max(1, -(-256 // S))          # aim for >= 256 rows per step
    bt = int(max(1, min(B, target, cap)))
    while B % bt:
        bt -= 1
    return bt


def attention1d_forward(q, k, v, params, h):
    """params = ((wq, bq), (wk, bk), (wv, bv), (wo, bo)), weights in nn.Linear (out, in) layout."""
    B, S, D = q.shape
    assert D % h == 0
    d_k = D // h
    (wq, bq), (wk, bk), (wv, bv), (wo, bo) = params
    dt = q.dtype

    # Host-side (free) re-layouts into per-head slabs whose last two dims are the
    # full array dims, so the BlockSpecs satisfy the (8, 128) rule even when d_k < 128.
    def per_head_in(w):                    # (out,in) -> (h, D, d_k); x @ w_h = head's proj
        return jnp.transpose(w, (1, 0)).reshape(D, h, d_k).transpose(1, 0, 2).astype(dt)

    wq_h, wk_h, wv_h = per_head_in(wq), per_head_in(wk), per_head_in(wv)
    wo_h = jnp.transpose(wo, (1, 0)).reshape(h, d_k, D).astype(dt)   # ctx_h @ wo_h
    bq_h = bq.reshape(h, 1, d_k).astype(jnp.float32)
    bk_h = bk.reshape(h, 1, d_k).astype(jnp.float32)
    bv_h = bv.reshape(h, 1, d_k).astype(jnp.float32)
    bo_2 = bo.reshape(1, D).astype(jnp.float32)

    bt = _pick_batch_tile(B, S, D, d_k, dt.itemsize)
    grid = (B // bt, h)

    act_spec = pl.BlockSpec((bt, S, D), lambda b, j: (b, 0, 0))      # constant over heads
    w_in_spec = pl.BlockSpec((1, D, d_k), lambda b, j: (j, 0, 0))
    b_in_spec = pl.BlockSpec((1, 1, d_k), lambda b, j: (j, 0, 0))
    w_out_spec = pl.BlockSpec((1, d_k, D), lambda b, j: (j, 0, 0))
    b_out_spec = pl.BlockSpec((1, D), lambda b, j: (0, 0))

    kernel = functools.partial(_mha_head_kernel, bt=bt, s=S, h=h, d_k=d_k,
                               scale=float(1.0 / math.sqrt(d_k)))

    return pl.pallas_call(
        kernel,
        out_shape=jax.ShapeDtypeStruct((B, S, D), dt),
        grid_spec=pltpu.PrefetchScalarGridSpec(
            num_scalar_prefetch=0,
            grid=grid,
            in_specs=[act_spec, act_spec, act_spec,
                      w_in_spec, b_in_spec,
                      w_in_spec, b_in_spec,
                      w_in_spec, b_in_spec,
                      w_out_spec, b_out_spec],
            out_specs=pl.BlockSpec((bt, S, D), lambda b, j: (b, 0, 0)),
            scratch_shapes=[pltpu.VMEM((bt * S, D), jnp.float32)],
        ),
        compiler_params=pltpu.CompilerParams(
            dimension_semantics=("parallel", "arbitrary")),
    )(q, k, v, wq_h, bq_h, wk_h, bk_h, wv_h, bv_h, wo_h, bo_2)


def _reference_forward(q, k, v, params, h):
    """Pure-JAX mirror of Attention1D.forward (eval mode, no mask) for verification."""
    B, S, D = q.shape
    d_k = D // h
    (wq, bq), (wk, bk), (wv, bv), (wo, bo) = params

    def lin(x, w, b):
        return x @ w.T + b

    def split_heads(x):
        return x.reshape(B, S, h, d_k).transpose(0, 2, 1, 3)   # (B, h, S, d_k)

    Q, K, V = split_heads(lin(q, wq, bq)), split_heads(lin(k, wk, bk)), split_heads(lin(v, wv, bv))
    scores = jnp.einsum("bhqd,bhkd->bhqk", Q, K) / math.sqrt(d_k)
    p = jax.nn.softmax(scores, axis=-1)
    x = jnp.einsum("bhqk,bhkd->bhqd", p, V)
    x = x.transpose(0, 2, 1, 3).reshape(B, S, D)
    return lin(x, wo, bo)


if __name__ == "__main__":
    # Small shapes consistent with the module: d_model divisible by h.
    B, S, D, H = 2, 8, 32, 4

    key = jax.random.PRNGKey(0)
    keys = jax.random.split(key, 11)

    # Deterministic parameter init (nn.Linear-style shapes: weight (D, D), bias (D,)).
    bound = 1.0 / math.sqrt(D)
    def init_linear(kw, kb):
        w = jax.random.uniform(kw, (D, D), jnp.float32, -bound, bound)
        b = jax.random.uniform(kb, (D,), jnp.float32, -bound, bound)
        return w, b

    params = (init_linear(keys[0], keys[1]),   # W_q, b_q
              init_linear(keys[2], keys[3]),   # W_k, b_k
              init_linear(keys[4], keys[5]),   # W_v, b_v
              init_linear(keys[6], keys[7]))   # W_out, b_out

    q = jax.random.normal(keys[8], (B, S, D), jnp.float32)
    k = jax.random.normal(keys[9], (B, S, D), jnp.float32)
    v = jax.random.normal(keys[10], (B, S, D), jnp.float32)

    out = attention1d_forward(q, k, v, params, H)
    out = jax.block_until_ready(out)

    ref = _reference_forward(q, k, v, params, H)
    # Tolerance covers the approximate (EUP) reciprocal in the softmax normalization.
    np.testing.assert_allclose(np.asarray(out), np.asarray(ref), rtol=2e-3, atol=2e-3)

    print("KERNEL_OK")
</pallas_src>

<mosaic_0001>
module attributes {stable_mosaic.version = 11 : i64} {
  func.func @_mha_head_kernel(%arg0: i32, %arg1: i32, %arg2: memref<2x8x32xf32, #tpu.memory_space<vmem>>, %arg3: memref<2x8x32xf32, #tpu.memory_space<vmem>>, %arg4: memref<2x8x32xf32, #tpu.memory_space<vmem>>, %arg5: memref<1x32x8xf32, #tpu.memory_space<vmem>>, %arg6: memref<1x1x8xf32, #tpu.memory_space<vmem>>, %arg7: memref<1x32x8xf32, #tpu.memory_space<vmem>>, %arg8: memref<1x1x8xf32, #tpu.memory_space<vmem>>, %arg9: memref<1x32x8xf32, #tpu.memory_space<vmem>>, %arg10: memref<1x1x8xf32, #tpu.memory_space<vmem>>, %arg11: memref<1x8x32xf32, #tpu.memory_space<vmem>>, %arg12: memref<1x32xf32, #tpu.memory_space<vmem>>, %arg13: memref<2x8x32xf32, #tpu.memory_space<vmem>>, %arg14: memref<16x32xf32, #tpu.memory_space<vmem>>) attributes {dimension_semantics = [#tpu.dimension_semantics<parallel>, #tpu.dimension_semantics<arbitrary>], iteration_bounds = array<i64: 1, 4>, scalar_prefetch = 0 : i64, scratch_operands = 1 : i64, tpu.core_type = #tpu.core_type<tc>, window_params = [{transform_indices = @transform_0, window_bounds = array<i64: 2, 8, 32>}, {transform_indices = @transform_1, window_bounds = array<i64: 2, 8, 32>}, {transform_indices = @transform_2, window_bounds = array<i64: 2, 8, 32>}, {transform_indices = @transform_3, window_bounds = array<i64: 1, 32, 8>}, {transform_indices = @transform_4, window_bounds = array<i64: 1, 1, 8>}, {transform_indices = @transform_5, window_bounds = array<i64: 1, 32, 8>}, {transform_indices = @transform_6, window_bounds = array<i64: 1, 1, 8>}, {transform_indices = @transform_7, window_bounds = array<i64: 1, 32, 8>}, {transform_indices = @transform_8, window_bounds = array<i64: 1, 1, 8>}, {transform_indices = @transform_9, window_bounds = array<i64: 1, 8, 32>}, {pipeline_mode = #tpu.pipeline_mode<synchronous>, transform_indices = @transform_10, window_bounds = array<i64: 1, 32>}, {transform_indices = @transform_11, window_bounds = array<i64: 2, 8, 32>}]} {
    %c0_i32 = arith.constant 0 : i32
    %0 = arith.cmpi eq, %arg1, %c0_i32 : i32
    %1 = arith.extui %0 : i1 to i32
    %c0_i32_0 = arith.constant 0 : i32
    %2 = arith.cmpi ne, %1, %c0_i32_0 : i32
    scf.if %2 {
      %cst_43 = arith.constant 0.000000e+00 : f32
      %57 = vector.broadcast %cst_43 : f32 to vector<16x32xf32>
      %c0_44 = arith.constant 0 : index
      %c0_45 = arith.constant 0 : index
      %58 = vector.load %arg14[%c0_44, %c0_45] : memref<16x32xf32, #tpu.memory_space<vmem>>, vector<16x32xf32>
      tpu.vector_store %arg14[%c0_44, %c0_45], %57 {strides = array<i32>} : memref<16x32xf32, #tpu.memory_space<vmem>>, vector<16x32xf32>,
    } else {
    }
    %c0 = arith.constant 0 : index
    %c0_1 = arith.constant 0 : index
    %c0_2 = arith.constant 0 : index
    %3 = vector.load %arg2[%c0, %c0_1, %c0_2] : memref<2x8x32xf32, #tpu.memory_space<vmem>>, vector<2x8x32xf32>
    %4 = vector.shape_cast %3 : vector<2x8x32xf32> to vector<16x32xf32>
    %c0_3 = arith.constant 0 : index
    %c0_4 = arith.constant 0 : index
    %c0_5 = arith.constant 0 : index
    %5 = vector.load %arg3[%c0_3, %c0_4, %c0_5] : memref<2x8x32xf32, #tpu.memory_space<vmem>>, vector<2x8x32xf32>
    %6 = vector.shape_cast %5 : vector<2x8x32xf32> to vector<16x32xf32>
    %c0_6 = arith.constant 0 : index
    %c0_7 = arith.constant 0 : index
    %c0_8 = arith.constant 0 : index
    %7 = vector.load %arg4[%c0_6, %c0_7, %c0_8] : memref<2x8x32xf32, #tpu.memory_space<vmem>>, vector<2x8x32xf32>
    %8 = vector.shape_cast %7 : vector<2x8x32xf32> to vector<16x32xf32>
    %c0_9 = arith.constant 0 : index
    %c0_10 = arith.constant 0 : index
    %c0_11 = arith.constant 0 : index
    %9 = vector.load %arg5[%c0_9, %c0_10, %c0_11] : memref<1x32x8xf32, #tpu.memory_space<vmem>>, vector<1x32x8xf32>
    %10 = vector.shape_cast %9 : vector<1x32x8xf32> to vector<32x8xf32>
    %c0_12 = arith.constant 0 : index
    %c0_13 = arith.constant 0 : index
    %c0_14 = arith.constant 0 : index
    %11 = vector.load %arg7[%c0_12, %c0_13, %c0_14] : memref<1x32x8xf32, #tpu.memory_space<vmem>>, vector<1x32x8xf32>
    %12 = vector.shape_cast %11 : vector<1x32x8xf32> to vector<32x8xf32>
    %c0_15 = arith.constant 0 : index
    %c0_16 = arith.constant 0 : index
    %c0_17 = arith.constant 0 : index
    %13 = vector.load %arg9[%c0_15, %c0_16, %c0_17] : memref<1x32x8xf32, #tpu.memory_space<vmem>>, vector<1x32x8xf32>
    %14 = vector.shape_cast %13 : vector<1x32x8xf32> to vector<32x8xf32>
    %c0_18 = arith.constant 0 : index
    %c0_19 = arith.constant 0 : index
    %c0_20 = arith.constant 0 : index
    %15 = vector.load %arg11[%c0_18, %c0_19, %c0_20] : memref<1x8x32xf32, #tpu.memory_space<vmem>>, vector<1x8x32xf32>
    %16 = vector.shape_cast %15 : vector<1x8x32xf32> to vector<8x32xf32>
    %cst = arith.constant dense<0.000000e+00> : vector<16x8xf32>
    %17 = tpu.matmul %4, %10, %cst {dimension_numbers = #tpu.dot_dimension_numbers<[1], [0], [0], [1], [0, 0, 1, 1], [], []>} : vector<16x32xf32>, vector<32x8xf32>, vector<16x8xf32> -> vector<16x8xf32>
    %c0_21 = arith.constant 0 : index
    %c0_22 = arith.constant 0 : index
    %c0_23 = arith.constant 0 : index
    %18 = vector.load %arg6[%c0_21, %c0_22, %c0_23] : memref<1x1x8xf32, #tpu.memory_space<vmem>>, vector<1x1x8xf32>
    %19 = vector.shape_cast %18 : vector<1x1x8xf32> to vector<1x8xf32>
    %20 = vector.broadcast %19 : vector<1x8xf32> to vector<16x8xf32>
    %21 = arith.addf %17, %20 : vector<16x8xf32>
    %cst_24 = arith.constant dense<0.000000e+00> : vector<16x8xf32>
    %22 = tpu.matmul %6, %12, %cst_24 {dimension_numbers = #tpu.dot_dimension_numbers<[1], [0], [0], [1], [0, 0, 1, 1], [], []>} : vector<16x32xf32>, vector<32x8xf32>, vector<16x8xf32> -> vector<16x8xf32>
    %c0_25 = arith.constant 0 : index
    %c0_26 = arith.constant 0 : index
    %c0_27 = arith.constant 0 : index
    %23 = vector.load %arg8[%c0_25, %c0_26, %c0_27] : memref<1x1x8xf32, #tpu.memory_space<vmem>>, vector<1x1x8xf32>
    %24 = vector.shape_cast %23 : vector<1x1x8xf32> to vector<1x8xf32>
    %25 = vector.broadcast %24 : vector<1x8xf32> to vector<16x8xf32>
    %26 = arith.addf %22, %25 : vector<16x8xf32>
    %cst_28 = arith.constant dense<0.000000e+00> : vector<16x8xf32>
    %27 = tpu.matmul %8, %14, %cst_28 {dimension_numbers = #tpu.dot_dimension_numbers<[1], [0], [0], [1], [0, 0, 1, 1], [], []>} : vector<16x32xf32>, vector<32x8xf32>, vector<16x8xf32> -> vector<16x8xf32>
    %c0_29 = arith.constant 0 : index
    %c0_30 = arith.constant 0 : index
    %c0_31 = arith.constant 0 : index
    %28 = vector.load %arg10[%c0_29, %c0_30, %c0_31] : memref<1x1x8xf32, #tpu.memory_space<vmem>>, vector<1x1x8xf32>
    %29 = vector.shape_cast %28 : vector<1x1x8xf32> to vector<1x8xf32>
    %30 = vector.broadcast %29 : vector<1x8xf32> to vector<16x8xf32>
    %31 = arith.addf %27, %30 : vector<16x8xf32>
    %cst_32 = arith.constant 0.353553385 : f32
    %32 = vector.broadcast %cst_32 : f32 to vector<16x8xf32>
    %33 = arith.mulf %21, %32 : vector<16x8xf32>
    %34 = vector.shape_cast %33 : vector<16x8xf32> to vector<2x8x8xf32>
    %35 = vector.shape_cast %26 : vector<16x8xf32> to vector<2x8x8xf32>
    %36 = vector.shape_cast %31 : vector<16x8xf32> to vector<2x8x8xf32>
    "tpu.trace_start"() <{level = 10 : i32, message = "bqd,bkd->bqk"}> : () -> ()
    %cst_33 = arith.constant dense<0.000000e+00> : vector<2x8x8xf32>
    %37 = tpu.matmul %34, %35, %cst_33 {dimension_numbers = #tpu.dot_dimension_numbers<[2], [2], [1], [1], [0, 0, 0, 1, 1, 1], [0], [0]>} : vector<2x8x8xf32>, vector<2x8x8xf32>, vector<2x8x8xf32> -> vector<2x8x8xf32>
    "tpu.trace_stop"() : () -> ()
    %cst_34 = arith.constant dense<0xFF800000> : vector<2x8xf32>
    %38 = vector.multi_reduction <maximumf>, %37, %cst_34 [2] : vector<2x8x8xf32> to vector<2x8xf32>
    %39 = vector.shape_cast %38 : vector<2x8xf32> to vector<2x8x1xf32>
    %40 = vector.broadcast %39 : vector<2x8x1xf32> to vector<2x8x8xf32>
    %41 = arith.subf %37, %40 : vector<2x8x8xf32>
    %42 = math.exp %41 : vector<2x8x8xf32>
    %cst_35 = arith.constant dense<0.000000e+00> : vector<2x8xf32>
    %43 = vector.multi_reduction <add>, %42, %cst_35 [2] : vector<2x8x8xf32> to vector<2x8xf32>
    %44 = vector.shape_cast %43 : vector<2x8xf32> to vector<2x8x1xf32>
    %45 = tpu.reciprocal %44 {approx = true} : vector<2x8x1xf32> -> vector<2x8x1xf32>
    %46 = vector.broadcast %45 : vector<2x8x1xf32> to vector<2x8x8xf32>
    %47 = arith.mulf %42, %46 : vector<2x8x8xf32>
    "tpu.trace_start"() <{level = 10 : i32, message = "bqk,bkd->bqd"}> : () -> ()
    %cst_36 = arith.constant dense<0.000000e+00> : vector<2x8x8xf32>
    %48 = tpu.matmul %47, %36, %cst_36 {dimension_numbers = #tpu.dot_dimension_numbers<[2], [1], [1], [2], [0, 0, 0, 1, 1, 2], [0], [0]>} : vector<2x8x8xf32>, vector<2x8x8xf32>, vector<2x8x8xf32> -> vector<2x8x8xf32>
    "tpu.trace_stop"() : () -> ()
    %49 = vector.shape_cast %48 : vector<2x8x8xf32> to vector<16x8xf32>
    %c0_37 = arith.constant 0 : index
    %c0_38 = arith.constant 0 : index
    %50 = vector.load %arg14[%c0_37, %c0_38] : memref<16x32xf32, #tpu.memory_space<vmem>>, vector<16x32xf32>
    %cst_39 = arith.constant dense<0.000000e+00> : vector<16x32xf32>
    %51 = tpu.matmul %49, %16, %cst_39 {dimension_numbers = #tpu.dot_dimension_numbers<[1], [0], [0], [1], [0, 0, 1, 1], [], []>} : vector<16x8xf32>, vector<8x32xf32>, vector<16x32xf32> -> vector<16x32xf32>
    %52 = arith.addf %50, %51 : vector<16x32xf32>
    %c0_40 = arith.constant 0 : index
    %c0_41 = arith.constant 0 : index
    %53 = vector.load %arg14[%c0_40, %c0_41] : memref<16x32xf32, #tpu.memory_space<vmem>>, vector<16x32xf32>
    tpu.vector_store %arg14[%c0_40, %c0_41], %52 {strides = array<i32>} : memref<16x32xf32, #tpu.memory_space<vmem>>, vector<16x32xf32>,
    %c3_i32 = arith.constant 3 : i32
    %54 = arith.cmpi eq, %arg1, %c3_i32 : i32
    %55 = arith.extui %54 : i1 to i32
    %c0_i32_42 = arith.constant 0 : i32
    %56 = arith.cmpi ne, %55, %c0_i32_42 : i32
    scf.if %56 {
      %c0_43 = arith.constant 0 : index
      %c0_44 = arith.constant 0 : index
      %57 = vector.load %arg14[%c0_43, %c0_44] : memref<16x32xf32, #tpu.memory_space<vmem>>, vector<16x32xf32>
      %c0_45 = arith.constant 0 : index
      %c0_46 = arith.constant 0 : index
      %58 = vector.load %arg12[%c0_45, %c0_46] : memref<1x32xf32, #tpu.memory_space<vmem>>, vector<1x32xf32>
      %59 = vector.broadcast %58 : vector<1x32xf32> to vector<16x32xf32>
      %60 = arith.addf %57, %59 : vector<16x32xf32>
      %61 = vector.shape_cast %60 : vector<16x32xf32> to vector<2x8x32xf32>
      %c0_47 = arith.constant 0 : index
      %c0_48 = arith.constant 0 : index
      %c0_49 = arith.constant 0 : index
      %62 = vector.load %arg13[%c0_47, %c0_48, %c0_49] : memref<2x8x32xf32, #tpu.memory_space<vmem>>, vector<2x8x32xf32>
      tpu.vector_store %arg13[%c0_47, %c0_48, %c0_49], %61 {strides = array<i32>} : memref<2x8x32xf32, #tpu.memory_space<vmem>>, vector<2x8x32xf32>,
    } else {
    }
    return
  }
  func.func @transform_0(%arg0: i32, %arg1: i32) -> (i32, i32, i32) {
    %c0_i32 = arith.constant 0 : i32
    %c0_i32_0 = arith.constant 0 : i32
    %c0_i32_1 = arith.constant 0 : i32
    return %arg0, %c0_i32, %c0_i32_0 : i32, i32, i32
  }
  func.func @transform_1(%arg0: i32, %arg1: i32) -> (i32, i32, i32) {
    %c0_i32 = arith.constant 0 : i32
    %c0_i32_0 = arith.constant 0 : i32
    %c0_i32_1 = arith.constant 0 : i32
    return %arg0, %c0_i32, %c0_i32_0 : i32, i32, i32
  }
  func.func @transform_2(%arg0: i32, %arg1: i32) -> (i32, i32, i32) {
    %c0_i32 = arith.constant 0 : i32
    %c0_i32_0 = arith.constant 0 : i32
    %c0_i32_1 = arith.constant 0 : i32
    return %arg0, %c0_i32, %c0_i32_0 : i32, i32, i32
  }
  func.func @transform_3(%arg0: i32, %arg1: i32) -> (i32, i32, i32) {
    %c0_i32 = arith.constant 0 : i32
    %c0_i32_0 = arith.constant 0 : i32
    %c0_i32_1 = arith.constant 0 : i32
    return %arg1, %c0_i32, %c0_i32_0 : i32, i32, i32
  }
  func.func @transform_4(%arg0: i32, %arg1: i32) -> (i32, i32, i32) {
    %c0_i32 = arith.constant 0 : i32
    %c0_i32_0 = arith.constant 0 : i32
    %c0_i32_1 = arith.constant 0 : i32
    return %arg1, %c0_i32, %c0_i32_0 : i32, i32, i32
  }
  func.func @transform_5(%arg0: i32, %arg1: i32) -> (i32, i32, i32) {
    %c0_i32 = arith.constant 0 : i32
    %c0_i32_0 = arith.constant 0 : i32
    %c0_i32_1 = arith.constant 0 : i32
    return %arg1, %c0_i32, %c0_i32_0 : i32, i32, i32
  }
  func.func @transform_6(%arg0: i32, %arg1: i32) -> (i32, i32, i32) {
    %c0_i32 = arith.constant 0 : i32
    %c0_i32_0 = arith.constant 0 : i32
    %c0_i32_1 = arith.constant 0 : i32
    return %arg1, %c0_i32, %c0_i32_0 : i32, i32, i32
  }
  func.func @transform_7(%arg0: i32, %arg1: i32) -> (i32, i32, i32) {
    %c0_i32 = arith.constant 0 : i32
    %c0_i32_0 = arith.constant 0 : i32
    %c0_i32_1 = arith.constant 0 : i32
    return %arg1, %c0_i32, %c0_i32_0 : i32, i32, i32
  }
  func.func @transform_8(%arg0: i32, %arg1: i32) -> (i32, i32, i32) {
    %c0_i32 = arith.constant 0 : i32
    %c0_i32_0 = arith.constant 0 : i32
    %c0_i32_1 = arith.constant 0 : i32
    return %arg1, %c0_i32, %c0_i32_0 : i32, i32, i32
  }
  func.func @transform_9(%arg0: i32, %arg1: i32) -> (i32, i32, i32) {
    %c0_i32 = arith.constant 0 : i32
    %c0_i32_0 = arith.constant 0 : i32
    %c0_i32_1 = arith.constant 0 : i32
    return %arg1, %c0_i32, %c0_i32_0 : i32, i32, i32
  }
  func.func @transform_10(%arg0: i32, %arg1: i32) -> (i32, i32) {
    %c0_i32 = arith.constant 0 : i32
    %c0_i32_0 = arith.constant 0 : i32
    %c0_i32_1 = arith.constant 0 : i32
    return %c0_i32, %c0_i32_0 : i32, i32
  }
  func.func @transform_11(%arg0: i32, %arg1: i32) -> (i32, i32, i32) {
    %c0_i32 = arith.constant 0 : i32
    %c0_i32_0 = arith.constant 0 : i32
    %c0_i32_1 = arith.constant 0 : i32
    return %arg0, %c0_i32, %c0_i32_0 : i32, i32, i32
  }
}

</mosaic_0001>

<llo_original>
// kernel: tpu_custom_call.1
$region0: #{tpu_custom_call.1}
  #allocation0 [shape = 'u32[]', space=smem, size = 0x4, offset = 0x4, fixed_abs, tag = 'smem constant byte address 0x4 - core index']
  #allocation1 [shape = 'u32[72,128]{1,0:T(1,128)}', space=vmem, size = 0x9000, scoped, tag = 'internal scratch']
  #allocation2 [shape = 'f32[16,32]{1,0:T(8,128)}', space=vmem, size = 0x2000, scoped, tag = 'scratch operand']
  %s0 = inlined_call_operand.vmem [shape: f32[2,8,32], index: 0, kind: input, shape index: {}]
  %s1 = inlined_call_operand.vmem [shape: f32[2,8,32], index: 1, kind: input, shape index: {}]
  %s2 = inlined_call_operand.vmem [shape: f32[2,8,32], index: 2, kind: input, shape index: {}]
  %s3 = inlined_call_operand.vmem [shape: f32[4,32,8], index: 3, kind: input, shape index: {}]
  %s4 = inlined_call_operand.vmem [shape: f32[4,1,8], index: 4, kind: input, shape index: {}]
  %s5 = inlined_call_operand.vmem [shape: f32[4,32,8], index: 5, kind: input, shape index: {}]
  %s6 = inlined_call_operand.vmem [shape: f32[4,1,8], index: 6, kind: input, shape index: {}]
  %s7 = inlined_call_operand.vmem [shape: f32[4,32,8], index: 7, kind: input, shape index: {}]
  %s8 = inlined_call_operand.vmem [shape: f32[4,1,8], index: 8, kind: input, shape index: {}]
  %s9 = inlined_call_operand.vmem [shape: f32[4,8,32], index: 9, kind: input, shape index: {}]
  %s10 = inlined_call_operand.vmem [shape: f32[1,32], index: 10, kind: input, shape index: {}]
  %s11 = inlined_call_operand.hbm [shape: f32[2,8,32], index: 11, kind: output, shape index: {}]
  %s12 = sld [smem:[#allocation0]]
  $region85: #{tpu_custom_call.1} parent=0
    _
  %s14 = ssub.s32 1, %s12
  %s15 = scalar_select 0, %s14, %s12
  $region1: #{tpu_custom_call.1} parent=0
    #allocation3 [shape = 'u8[8192]{0}', space=vmem, size = 0x2000, scoped, tag = 'output window, operand 0, single buffered']
    #allocation4 [shape = 's32[2]{0}', space=sflag, size = 0x8, scoped, tag = 'scoped memory for tpu_custom_call.1']
    %16 = vsyncpa [#allocation4], 0
    loop: start=0, step=1, limit=6
    $region2: #{tpu_custom_call.1} parent=1 // loop_pre_header
      _
    $region3: #{tpu_custom_call.1} parent=1 // loop_header
      %s18 = sphi 0, %s22
      %p19 = scmp.ge.s32.totalorder %s18, 6
      %s25 = sphi 0, %s37
      %s26 = sphi 0, %s33
      %s27 = sphi 0, %s25
      %s28 = sphi 0, %s26
      %s29 = sphi 0, %s27
      %s30 = sphi 0, %s28
      %s40 = sphi 0, %s42
      %s43 = sphi 0, %s40
      %s44 = sphi 0, %s43
      %s60 = sphi 0, %s44
      %s66 = sphi 0, %s68
      %s69 = sphi 0, %s66
      %s70 = sphi 0, %s69
      %s86 = sphi 0, %s70
      %s92 = sphi 0, %s94
      %s95 = sphi 0, %s92
      %s96 = sphi 0, %s95
      %s112 = sphi 0, %s96
      %s118 = sphi 0, %s120
      %s121 = sphi 0, %s118
      %s122 = sphi 0, %s121
      %s138 = sphi 0, %s122
      %s144 = sphi 0, %s146
      %s147 = sphi 0, %s144
      %s148 = sphi 0, %s147
      %s164 = sphi 0, %s148
      %s170 = sphi 0, %s172
      %s173 = sphi 0, %s170
      %s174 = sphi 0, %s173
      %s190 = sphi 0, %s174
      %s196 = sphi 0, %s198
      %s199 = sphi 0, %s196
      %s200 = sphi 0, %s199
      %s216 = sphi 0, %s200
      %s222 = sphi 0, %s224
      %s225 = sphi 0, %s222
      %s226 = sphi 0, %s225
      %s242 = sphi 0, %s226
      %s248 = sphi 0, %s250
      %s251 = sphi 0, %s248
      %s252 = sphi 0, %s251
      %s268 = sphi 0, %s252
      %s274 = sphi 0, %s276
      %s277 = sphi 0, %s274
      %s278 = sphi 0, %s277
      %s294 = sphi 0, %s278
      %s298 = sphi 0, %s298
      %s300 = sphi 0, %s298
      %s301 = sphi 0, %s300
      %s315 = sphi 0, %s301
      %s321 = sphi 0, %s323
      %s324 = sphi 0, %s321
      %s325 = sphi 0, %s324
      %s341 = sphi 0, %s325
    $region4: #{tpu_custom_call.1} parent=1 // loop_header_branch
      %21 = sbr.rel (%p19) target = $region8
    $region5: #{tpu_custom_call.1} parent=1 // loop_body
      %s23 = ssub.s32 %s18, 1
      %s24 = ssub.s32 %s18, 2
      %s31 = sadd.s32 1, %s26
      %p32 = scmp.ge.s32.totalorder %s31, 4
      %s33 = scalar_select %p32, 0, %s31
      %s34 = sadd.s32 1, %s25
      %s35 = scalar_select %p32, %s34, %s25
      %p36 = scmp.ge.s32.totalorder %s35, 1
      %s37 = scalar_select %p36, 0, %s35
      %s38 = ssub.s32 %s25, %s37
      %p39 = scmp.eq.s32.totalorder %s38, 0
      %s41 = sadd.s32 %s40, 1
      %s42 = scalar_select %p39, %s40, %s41
      %p45 = pneg %p39
      %p46 = scmp.eq.s32.totalorder %s18, 3
      %p47 = por %p45, %p46
      %p48 = scmp.ne.s32.totalorder %s40, %s43
      %p49 = scmp.eq.s32.totalorder %s18, 0
      %p50 = por %p48, %p49
      %p51 = scmp.ne.s32.totalorder %s40, %s43
      %p52 = scmp.eq.s32.totalorder %s23, 3
      %p53 = por %p51, %p52
      %p54 = scmp.ne.s32.totalorder %s43, %s44
      %p55 = scmp.eq.s32.totalorder %s23, 0
      %p56 = por %p54, %p55
      %p57 = scmp.ne.s32.totalorder %s43, %s44
      %p58 = scmp.eq.s32.totalorder %s24, 3
      %p59 = por %p57, %p58
      %p61 = scmp.ne.s32.totalorder %s44, %s60
      %p62 = scmp.eq.s32.totalorder %s24, 0
      %p63 = por %p61, %p62
      %s64 = ssub.s32 %s25, %s37
      %p65 = scmp.eq.s32.totalorder %s64, 0
      %s67 = sadd.s32 %s66, 1
      %s68 = scalar_select %p65, %s66, %s67
      %p71 = pneg %p65
      %p72 = scmp.eq.s32.totalorder %s18, 3
      %p73 = por %p71, %p72
      %p74 = scmp.ne.s32.totalorder %s66, %s69
      %p75 = scmp.eq.s32.totalorder %s18, 0
      %p76 = por %p74, %p75
      %p77 = scmp.ne.s32.totalorder %s66, %s69
      %p78 = scmp.eq.s32.totalorder %s23, 3
      %p79 = por %p77, %p78
      %p80 = scmp.ne.s32.totalorder %s69, %s70
      %p81 = scmp.eq.s32.totalorder %s23, 0
      %p82 = por %p80, %p81
      %p83 = scmp.ne.s32.totalorder %s69, %s70
      %p84 = scmp.eq.s32.totalorder %s24, 3
      %p85 = por %p83, %p84
      %p87 = scmp.ne.s32.totalorder %s70, %s86
      %p88 = scmp.eq.s32.totalorder %s24, 0
      %p89 = por %p87, %p88
      %s90 = ssub.s32 %s25, %s37
      %p91 = scmp.eq.s32.totalorder %s90, 0
      %s93 = sadd.s32 %s92, 1
      %s94 = scalar_select %p91, %s92, %s93
      %p97 = pneg %p91
      %p98 = scmp.eq.s32.totalorder %s18, 3
      %p99 = por %p97, %p98
      %p100 = scmp.ne.s32.totalorder %s92, %s95
      %p101 = scmp.eq.s32.totalorder %s18, 0
      %p102 = por %p100, %p101
      %p103 = scmp.ne.s32.totalorder %s92, %s95
      %p104 = scmp.eq.s32.totalorder %s23, 3
      %p105 = por %p103, %p104
      %p106 = scmp.ne.s32.totalorder %s95, %s96
      %p107 = scmp.eq.s32.totalorder %s23, 0
      %p108 = por %p106, %p107
      %p109 = scmp.ne.s32.totalorder %s95, %s96
      %p110 = scmp.eq.s32.totalorder %s24, 3
      %p111 = por %p109, %p110
      %p113 = scmp.ne.s32.totalorder %s96, %s112
      %p114 = scmp.eq.s32.totalorder %s24, 0
      %p115 = por %p113, %p114
      %s116 = ssub.s32 %s26, %s33
      %p117 = scmp.eq.s32.totalorder %s116, 0
      %s119 = sadd.s32 %s118, 1
      %s120 = scalar_select %p117, %s118, %s119
      %p123 = pneg %p117
      %p124 = scmp.eq.s32.totalorder %s18, 3
      %p125 = por %p123, %p124
      %p126 = scmp.ne.s32.totalorder %s118, %s121
      %p127 = scmp.eq.s32.totalorder %s18, 0
      %p128 = por %p126, %p127
      %p129 = scmp.ne.s32.totalorder %s118, %s121
      %p130 = scmp.eq.s32.totalorder %s23, 3
      %p131 = por %p129, %p130
      %p132 = scmp.ne.s32.totalorder %s121, %s122
      %p133 = scmp.eq.s32.totalorder %s23, 0
      %p134 = por %p132, %p133
      %p135 = scmp.ne.s32.totalorder %s121, %s122
      %p136 = scmp.eq.s32.totalorder %s24, 3
      %p137 = por %p135, %p136
      %p139 = scmp.ne.s32.totalorder %s122, %s138
      %p140 = scmp.eq.s32.totalorder %s24, 0
      %p141 = por %p139, %p140
      %s142 = ssub.s32 %s26, %s33
      %p143 = scmp.eq.s32.totalorder %s142, 0
      %s145 = sadd.s32 %s144, 1
      %s146 = scalar_select %p143, %s144, %s145
      %p149 = pneg %p143
      %p150 = scmp.eq.s32.totalorder %s18, 3
      %p151 = por %p149, %p150
      %p152 = scmp.ne.s32.totalorder %s144, %s147
      %p153 = scmp.eq.s32.totalorder %s18, 0
      %p154 = por %p152, %p153
      %p155 = scmp.ne.s32.totalorder %s144, %s147
      %p156 = scmp.eq.s32.totalorder %s23, 3
      %p157 = por %p155, %p156
      %p158 = scmp.ne.s32.totalorder %s147, %s148
      %p159 = scmp.eq.s32.totalorder %s23, 0
      %p160 = por %p158, %p159
      %p161 = scmp.ne.s32.totalorder %s147, %s148
      %p162 = scmp.eq.s32.totalorder %s24, 3
      %p163 = por %p161, %p162
      %p165 = scmp.ne.s32.totalorder %s148, %s164
      %p166 = scmp.eq.s32.totalorder %s24, 0
      %p167 = por %p165, %p166
      %s168 = ssub.s32 %s26, %s33
      %p169 = scmp.eq.s32.totalorder %s168, 0
      %s171 = sadd.s32 %s170, 1
      %s172 = scalar_select %p169, %s170, %s171
      %p175 = pneg %p169
      %p176 = scmp.eq.s32.totalorder %s18, 3
      %p177 = por %p175, %p176
      %p178 = scmp.ne.s32.totalorder %s170, %s173
      %p179 = scmp.eq.s32.totalorder %s18, 0
      %p180 = por %p178, %p179
      %p181 = scmp.ne.s32.totalorder %s170, %s173
      %p182 = scmp.eq.s32.totalorder %s23, 3
      %p183 = por %p181, %p182
      %p184 = scmp.ne.s32.totalorder %s173, %s174
      %p185 = scmp.eq.s32.totalorder %s23, 0
      %p186 = por %p184, %p185
      %p187 = scmp.ne.s32.totalorder %s173, %s174
      %p188 = scmp.eq.s32.totalorder %s24, 3
      %p189 = por %p187, %p188
      %p191 = scmp.ne.s32.totalorder %s174, %s190
      %p192 = scmp.eq.s32.totalorder %s24, 0
      %p193 = por %p191, %p192
      %s194 = ssub.s32 %s26, %s33
      %p195 = scmp.eq.s32.totalorder %s194, 0
      %s197 = sadd.s32 %s196, 1
      %s198 = scalar_select %p195, %s196, %s197
      %p201 = pneg %p195
      %p202 = scmp.eq.s32.totalorder %s18, 3
      %p203 = por %p201, %p202
      %p204 = scmp.ne.s32.totalorder %s196, %s199
      %p205 = scmp.eq.s32.totalorder %s18, 0
      %p206 = por %p204, %p205
      %p207 = scmp.ne.s32.totalorder %s196, %s199
      %p208 = scmp.eq.s32.totalorder %s23, 3
      %p209 = por %p207, %p208
      %p210 = scmp.ne.s32.totalorder %s199, %s200
      %p211 = scmp.eq.s32.totalorder %s23, 0
      %p212 = por %p210, %p211
      %p213 = scmp.ne.s32.totalorder %s199, %s200
      %p214 = scmp.eq.s32.totalorder %s24, 3
      %p215 = por %p213, %p214
      %p217 = scmp.ne.s32.totalorder %s200, %s216
      %p218 = scmp.eq.s32.totalorder %s24, 0
      %p219 = por %p217, %p218
      %s220 = ssub.s32 %s26, %s33
      %p221 = scmp.eq.s32.totalorder %s220, 0
      %s223 = sadd.s32 %s222, 1
      %s224 = scalar_select %p221, %s222, %s223
      %p227 = pneg %p221
      %p228 = scmp.eq.s32.totalorder %s18, 3
      %p229 = por %p227, %p228
      %p230 = scmp.ne.s32.totalorder %s222, %s225
      %p231 = scmp.eq.s32.totalorder %s18, 0
      %p232 = por %p230, %p231
      %p233 = scmp.ne.s32.totalorder %s222, %s225
      %p234 = scmp.eq.s32.totalorder %s23, 3
      %p235 = por %p233, %p234
      %p236 = scmp.ne.s32.totalorder %s225, %s226
      %p237 = scmp.eq.s32.totalorder %s23, 0
      %p238 = por %p236, %p237
      %p239 = scmp.ne.s32.totalorder %s225, %s226
      %p240 = scmp.eq.s32.totalorder %s24, 3
      %p241 = por %p239, %p240
      %p243 = scmp.ne.s32.totalorder %s226, %s242
      %p244 = scmp.eq.s32.totalorder %s24, 0
      %p245 = por %p243, %p244
      %s246 = ssub.s32 %s26, %s33
      %p247 = scmp.eq.s32.totalorder %s246, 0
      %s249 = sadd.s32 %s248, 1
      %s250 = scalar_select %p247, %s248, %s249
      %p253 = pneg %p247
      %p254 = scmp.eq.s32.totalorder %s18, 3
      %p255 = por %p253, %p254
      %p256 = scmp.ne.s32.totalorder %s248, %s251
      %p257 = scmp.eq.s32.totalorder %s18, 0
      %p258 = por %p256, %p257
      %p259 = scmp.ne.s32.totalorder %s248, %s251
      %p260 = scmp.eq.s32.totalorder %s23, 3
      %p261 = por %p259, %p260
      %p262 = scmp.ne.s32.totalorder %s251, %s252
      %p263 = scmp.eq.s32.totalorder %s23, 0
      %p264 = por %p262, %p263
      %p265 = scmp.ne.s32.totalorder %s251, %s252
      %p266 = scmp.eq.s32.totalorder %s24, 3
      %p267 = por %p265, %p266
      %p269 = scmp.ne.s32.totalorder %s252, %s268
      %p270 = scmp.eq.s32.totalorder %s24, 0
      %p271 = por %p269, %p270
      %s272 = ssub.s32 %s26, %s33
      %p273 = scmp.eq.s32.totalorder %s272, 0
      %s275 = sadd.s32 %s274, 1
      %s276 = scalar_select %p273, %s274, %s275
      %p279 = pneg %p273
      %p280 = scmp.eq.s32.totalorder %s18, 3
      %p281 = por %p279, %p280
      %p282 = scmp.ne.s32.totalorder %s274, %s277
      %p283 = scmp.eq.s32.totalorder %s18, 0
      %p284 = por %p282, %p283
      %p285 = scmp.ne.s32.totalorder %s274, %s277
      %p286 = scmp.eq.s32.totalorder %s23, 3
      %p287 = por %p285, %p286
      %p288 = scmp.ne.s32.totalorder %s277, %s278
      %p289 = scmp.eq.s32.totalorder %s23, 0
      %p290 = por %p288, %p289
      %p291 = scmp.ne.s32.totalorder %s277, %s278
      %p292 = scmp.eq.s32.totalorder %s24, 3
      %p293 = por %p291, %p292
      %p295 = scmp.ne.s32.totalorder %s278, %s294
      %p296 = scmp.eq.s32.totalorder %s24, 0
      %p297 = por %p295, %p296
      %s299 = sadd.s32 %s298, 1
      %p302 = scmp.eq.s32.totalorder %s18, 3
      %p303 = scmp.ne.s32.totalorder %s298, %s300
      %p304 = scmp.eq.s32.totalorder %s18, 0
      %p305 = por %p303, %p304
      %p306 = scmp.ne.s32.totalorder %s298, %s300
      %p307 = scmp.eq.s32.totalorder %s23, 3
      %p308 = por %p306, %p307
      %p309 = scmp.ne.s32.totalorder %s300, %s301
      %p310 = scmp.eq.s32.totalorder %s23, 0
      %p311 = por %p309, %p310
      %p312 = scmp.ne.s32.totalorder %s300, %s301
      %p313 = scmp.eq.s32.totalorder %s24, 3
      %p314 = por %p312, %p313
      %p316 = scmp.ne.s32.totalorder %s301, %s315
      %p317 = scmp.eq.s32.totalorder %s24, 0
      %p318 = por %p316, %p317
      %s319 = ssub.s32 %s25, %s37
      %p320 = scmp.eq.s32.totalorder %s319, 0
      %s322 = sadd.s32 %s321, 1
      %s323 = scalar_select %p320, %s321, %s322
      %p326 = pneg %p320
      %p327 = scmp.eq.s32.totalorder %s18, 3
      %p328 = por %p326, %p327
      %p329 = scmp.ne.s32.totalorder %s321, %s324
      %p330 = scmp.eq.s32.totalorder %s18, 0
      %p331 = por %p329, %p330
      %p332 = scmp.ne.s32.totalorder %s321, %s324
      %p333 = scmp.eq.s32.totalorder %s23, 3
      %p334 = por %p332, %p333
      %p335 = scmp.ne.s32.totalorder %s324, %s325
      %p336 = scmp.eq.s32.totalorder %s23, 0
      %p337 = por %p335, %p336
      %p338 = scmp.ne.s32.totalorder %s324, %s325
      %p339 = scmp.eq.s32.totalorder %s24, 3
      %p340 = por %p338, %p339
      %p342 = scmp.ne.s32.totalorder %s325, %s341
      %p343 = scmp.eq.s32.totalorder %s24, 0
      %p344 = por %p342, %p343
      %p345 = scmp.le.s32.totalorder 1, %s18
      %p346 = scmp.lt.s32.totalorder %s18, 5
      %p347 = pnand %p345, %p346
      %p348 = pneg %p347
      // Predicated region
      $region9: #{tpu_custom_call.1} parent=5 // pred_check
        _
      $region10: #{tpu_custom_call.1} parent=5 // pred_check_branch
        %350 = sbr.rel (%p347) target = $region12
      $region11: #{tpu_custom_call.1} parent=5 // pred_region
        %s351 = ssub.s32 %s18, 1
        // Predicated region
        $region13: #{tpu_custom_call.1} parent=11 // pred_check
          %p352 = pneg %p56
        $region14: #{tpu_custom_call.1} parent=11 // pred_check_branch
          %354 = sbr.rel (%p352) target = $region16
        $region15: #{tpu_custom_call.1} parent=11 // pred_region
          %s355 = smul.u32 2, %s27
          %p356 = scmp.lt.s32.totalorder %s355, 1
          %s357 = scalar_select %p356, %s355, 1
          %s358 = smul.addr %s357, 8
          %s359 = scalar_lea.vmem %s0, %s358
          %s360 = smul.u32 2, %s27
        $region16: #{tpu_custom_call.1} parent=11 // pred_fallthru
          _
        // Predicated region
        $region17: #{tpu_custom_call.1} parent=11 // pred_check
          %p361 = pneg %p82
        $region18: #{tpu_custom_call.1} parent=11 // pred_check_branch
          %363 = sbr.rel (%p361) target = $region20
        $region19: #{tpu_custom_call.1} parent=11 // pred_region
          %s364 = smul.u32 2, %s27
          %p365 = scmp.lt.s32.totalorder %s364, 1
          %s366 = scalar_select %p365, %s364, 1
          %s367 = smul.addr %s366, 8
          %s368 = scalar_lea.vmem %s1, %s367
          %s369 = smul.u32 2, %s27
        $region20: #{tpu_custom_call.1} parent=11 // pred_fallthru
          _
        // Predicated region
        $region21: #{tpu_custom_call.1} parent=11 // pred_check
          %p370 = pneg %p108
        $region22: #{tpu_custom_call.1} parent=11 // pred_check_branch
          %372 = sbr.rel (%p370) target = $region24
        $region23: #{tpu_custom_call.1} parent=11 // pred_region
          %s373 = smul.u32 2, %s27
          %p374 = scmp.lt.s32.totalorder %s373, 1
          %s375 = scalar_select %p374, %s373, 1
          %s376 = smul.addr %s375, 8
          %s377 = scalar_lea.vmem %s2, %s376
          %s378 = smul.u32 2, %s27
        $region24: #{tpu_custom_call.1} parent=11 // pred_fallthru
          _
        // Predicated region
        $region25: #{tpu_custom_call.1} parent=11 // pred_check
          %p379 = pneg %p311
        $region26: #{tpu_custom_call.1} parent=11 // pred_check_branch
          %381 = sbr.rel (%p379) target = $region28
        $region27: #{tpu_custom_call.1} parent=11 // pred_region
          _
        $region28: #{tpu_custom_call.1} parent=11 // pred_fallthru
          _
      $region12: #{tpu_custom_call.1} parent=5 // pred_fallthru
        _
      %p382 = scmp.lt.s32.totalorder %s18, 4
      // Predicated region
      $region29: #{tpu_custom_call.1} parent=5 // pred_check
        %p383 = pneg %p382
      $region30: #{tpu_custom_call.1} parent=5 // pred_check_branch
        %385 = sbr.rel (%p383) target = $region32
      $region31: #{tpu_custom_call.1} parent=5 // pred_region
        // Predicated region
        $region33: #{tpu_custom_call.1} parent=31 // pred_check
          %p386 = pneg %p128
        $region34: #{tpu_custom_call.1} parent=31 // pred_check_branch
          %388 = sbr.rel (%p386) target = $region36
        $region35: #{tpu_custom_call.1} parent=31 // pred_region
          %p389 = scmp.lt.s32.totalorder %s26, 3
          %s390 = scalar_select %p389, %s26, 3
          %s391 = smul.addr %s390, 4
          %s392 = smul.addr %s391, 8
          %s393 = scalar_lea.vmem %s3, %s392
        $region36: #{tpu_custom_call.1} parent=31 // pred_fallthru
          _
        // Predicated region
        $region37: #{tpu_custom_call.1} parent=31 // pred_check
          %p394 = pneg %p154
        $region38: #{tpu_custom_call.1} parent=31 // pred_check_branch
          %396 = sbr.rel (%p394) target = $region40
        $region39: #{tpu_custom_call.1} parent=31 // pred_region
          %p397 = scmp.lt.s32.totalorder %s26, 3
          %s398 = scalar_select %p397, %s26, 3
          %s399 = scalar_lea.vmem %s4, %s398
        $region40: #{tpu_custom_call.1} parent=31 // pred_fallthru
          _
        // Predicated region
        $region41: #{tpu_custom_call.1} parent=31 // pred_check
          %p400 = pneg %p180
        $region42: #{tpu_custom_call.1} parent=31 // pred_check_branch
          %402 = sbr.rel (%p400) target = $region44
        $region43: #{tpu_custom_call.1} parent=31 // pred_region
          %p403 = scmp.lt.s32.totalorder %s26, 3
          %s404 = scalar_select %p403, %s26, 3
          %s405 = smul.addr %s404, 4
          %s406 = smul.addr %s405, 8
          %s407 = scalar_lea.vmem %s5, %s406
        $region44: #{tpu_custom_call.1} parent=31 // pred_fallthru
          _
        // Predicated region
        $region45: #{tpu_custom_call.1} parent=31 // pred_check
          %p408 = pneg %p206
        $region46: #{tpu_custom_call.1} parent=31 // pred_check_branch
          %410 = sbr.rel (%p408) target = $region48
        $region47: #{tpu_custom_call.1} parent=31 // pred_region
          %p411 = scmp.lt.s32.totalorder %s26, 3
          %s412 = scalar_select %p411, %s26, 3
          %s413 = scalar_lea.vmem %s6, %s412
        $region48: #{tpu_custom_call.1} parent=31 // pred_fallthru
          _
        // Predicated region
        $region49: #{tpu_custom_call.1} parent=31 // pred_check
          %p414 = pneg %p232
        $region50: #{tpu_custom_call.1} parent=31 // pred_check_branch
          %416 = sbr.rel (%p414) target = $region52
        $region51: #{tpu_custom_call.1} parent=31 // pred_region
          %p417 = scmp.lt.s32.totalorder %s26, 3
          %s418 = scalar_select %p417, %s26, 3
          %s419 = smul.addr %s418, 4
          %s420 = smul.addr %s419, 8
          %s421 = scalar_lea.vmem %s7, %s420
        $region52: #{tpu_custom_call.1} parent=31 // pred_fallthru
          _
        // Predicated region
        $region53: #{tpu_custom_call.1} parent=31 // pred_check
          %p422 = pneg %p258
        $region54: #{tpu_custom_call.1} parent=31 // pred_check_branch
          %424 = sbr.rel (%p422) target = $region56
        $region55: #{tpu_custom_call.1} parent=31 // pred_region
          %p425 = scmp.lt.s32.totalorder %s26, 3
          %s426 = scalar_select %p425, %s26, 3
          %s427 = scalar_lea.vmem %s8, %s426
        $region56: #{tpu_custom_call.1} parent=31 // pred_fallthru
          _
        // Predicated region
        $region57: #{tpu_custom_call.1} parent=31 // pred_check
          %p428 = pneg %p284
        $region58: #{tpu_custom_call.1} parent=31 // pred_check_branch
          %430 = sbr.rel (%p428) target = $region60
        $region59: #{tpu_custom_call.1} parent=31 // pred_region
          %p431 = scmp.lt.s32.totalorder %s26, 3
          %s432 = scalar_select %p431, %s26, 3
          %s433 = smul.addr %s432, 8
          %s434 = scalar_lea.vmem %s9, %s433
        $region60: #{tpu_custom_call.1} parent=31 // pred_fallthru
          _
      $region32: #{tpu_custom_call.1} parent=5 // pred_fallthru
        _
      %p435 = scmp.le.s32.totalorder 1, %s18
      %p436 = scmp.lt.s32.totalorder %s18, 5
      %p437 = pnand %p435, %p436
      %p438 = pneg %p437
      // Predicated region
      $region61: #{tpu_custom_call.1} parent=5 // pred_check
        _
      $region62: #{tpu_custom_call.1} parent=5 // pred_check_branch
        %440 = sbr.rel (%p437) target = $region64
      $region63: #{tpu_custom_call.1} parent=5 // pred_region
        %s441 = ssub.s32 %s18, 1
        %s442 = smul.u32 2, %s27
        %p443 = scmp.lt.s32.totalorder %s442, 1
        %s444 = scalar_select %p443, %s442, 1
        %s445 = smul.addr %s444, 8
        %s446 = scalar_lea.vmem %s0, %s445
        %p447 = pneg %p56
        %p448 = pneg %p53
        %s449 = smul.u32 2, %s27
        %p450 = scmp.lt.s32.totalorder %s449, 1
        %s451 = scalar_select %p450, %s449, 1
        %s452 = smul.addr %s451, 8
        %s453 = scalar_lea.vmem %s1, %s452
        %p454 = pneg %p82
        %p455 = pneg %p79
        %s456 = smul.u32 2, %s27
        %p457 = scmp.lt.s32.totalorder %s456, 1
        %s458 = scalar_select %p457, %s456, 1
        %s459 = smul.addr %s458, 8
        %s460 = scalar_lea.vmem %s2, %s459
        %p461 = pneg %p108
        %p462 = pneg %p105
        %p463 = scmp.lt.s32.totalorder %s28, 3
        %s464 = scalar_select %p463, %s28, 3
        %s465 = smul.addr %s464, 4
        %s466 = smul.addr %s465, 8
        %s467 = scalar_lea.vmem %s3, %s466
        %p468 = pneg %p134
        %p469 = pneg %p131
        %p470 = scmp.lt.s32.totalorder %s28, 3
        %s471 = scalar_select %p470, %s28, 3
        %s472 = scalar_lea.vmem %s4, %s471
        %p473 = pneg %p160
        %p474 = pneg %p157
        %p475 = scmp.lt.s32.totalorder %s28, 3
        %s476 = scalar_select %p475, %s28, 3
        %s477 = smul.addr %s476, 4
        %s478 = smul.addr %s477, 8
        %s479 = scalar_lea.vmem %s5, %s478
        %p480 = pneg %p186
        %p481 = pneg %p183
        %p482 = scmp.lt.s32.totalorder %s28, 3
        %s483 = scalar_select %p482, %s28, 3
        %s484 = scalar_lea.vmem %s6, %s483
        %p485 = pneg %p212
        %p486 = pneg %p209
        %p487 = scmp.lt.s32.totalorder %s28, 3
        %s488 = scalar_select %p487, %s28, 3
        %s489 = smul.addr %s488, 4
        %s490 = smul.addr %s489, 8
        %s491 = scalar_lea.vmem %s7, %s490
        %p492 = pneg %p238
        %p493 = pneg %p235
        %p494 = scmp.lt.s32.totalorder %s28, 3
        %s495 = scalar_select %p494, %s28, 3
        %s496 = scalar_lea.vmem %s8, %s495
        %p497 = pneg %p264
        %p498 = pneg %p261
        %p499 = scmp.lt.s32.totalorder %s28, 3
        %s500 = scalar_select %p499, %s28, 3
        %s501 = smul.addr %s500, 8
        %s502 = scalar_lea.vmem %s9, %s501
        %p503 = pneg %p290
        %p504 = pneg %p287
        %p505 = pneg %p311
        %p506 = pneg %p308
        %p507 = pneg %p337
        %p508 = pneg %p334
        %s509 = smul.u32 2, %s27
        %p510 = scmp.lt.s32.totalorder %s509, 1
        %s511 = scalar_select %p510, %s509, 1
        %s512 = smul.addr %s511, 8
        %s513 = scalar_lea.vmem %s0, %s512
        %s514 = smul.u32 2, %s27
        %s515 = smul.u32 2, %s27
        %p516 = scmp.lt.s32.totalorder %s515, 1
        %s517 = scalar_select %p516, %s515, 1
        %s518 = smul.addr %s517, 8
        %s519 = scalar_lea.vmem %s1, %s518
        %s520 = smul.u32 2, %s27
        %s521 = smul.u32 2, %s27
        %p522 = scmp.lt.s32.totalorder %s521, 1
        %s523 = scalar_select %p522, %s521, 1
        %s524 = smul.addr %s523, 8
        %s525 = scalar_lea.vmem %s2, %s524
        %s526 = smul.u32 2, %s27
        %p527 = scmp.lt.s32.totalorder %s28, 3
        %s528 = scalar_select %p527, %s28, 3
        %s529 = smul.addr %s528, 4
        %s530 = smul.addr %s529, 8
        %s531 = scalar_lea.vmem %s3, %s530
        %p532 = scmp.lt.s32.totalorder %s28, 3
        %s533 = scalar_select %p532, %s28, 3
        %s534 = scalar_lea.vmem %s4, %s533
        %p535 = scmp.lt.s32.totalorder %s28, 3
        %s536 = scalar_select %p535, %s28, 3
        %s537 = smul.addr %s536, 4
        %s538 = smul.addr %s537, 8
        %s539 = scalar_lea.vmem %s5, %s538
        %p540 = scmp.lt.s32.totalorder %s28, 3
        %s541 = scalar_select %p540, %s28, 3
        %s542 = scalar_lea.vmem %s6, %s541
        %p543 = scmp.lt.s32.totalorder %s28, 3
        %s544 = scalar_select %p543, %s28, 3
        %s545 = smul.addr %s544, 4
        %s546 = smul.addr %s545, 8
        %s547 = scalar_lea.vmem %s7, %s546
        %p548 = scmp.lt.s32.totalorder %s28, 3
        %s549 = scalar_select %p548, %s28, 3
        %s550 = scalar_lea.vmem %s8, %s549
        %p551 = scmp.lt.s32.totalorder %s28, 3
        %s552 = scalar_select %p551, %s28, 3
        %s553 = smul.addr %s552, 8
        %s554 = scalar_lea.vmem %s9, %s553
        %s555 = smul.u32 2, %s27
        %p556 = scmp.eq.s32.totalorder %s28, 0
        // Predicated region
        $region65: #{tpu_custom_call.1} parent=63 // pred_check
          %p557 = pneg %p556
        $region66: #{tpu_custom_call.1} parent=63 // pred_check_branch
          %559 = sbr.rel (%p557) target = $region68
        $region67: #{tpu_custom_call.1} parent=63 // pred_region
          %vm560 = vcmask 261120
          %561 = vst.msk [vmem:[#allocation2] sm:$0xff] %vm560, 0.0
          %562 = vst.msk [vmem:[#allocation2 + $0x8] sm:$0xff] %vm560, 0.0
        $region68: #{tpu_custom_call.1} parent=63 // pred_fallthru
          _
        %v563 = vld [vmem:[%s513] sm:$0xff]
        %v564 = vld [vmem:[%s513 + $0x8] sm:$0xff]
        %v565 = vld [vmem:[%s519] sm:$0xff]
        %v566 = vld [vmem:[%s519 + $0x8] sm:$0xff]
        %v567 = vld [vmem:[%s525] sm:$0xff]
        %v568 = vld [vmem:[%s525 + $0x8] sm:$0xff]
        %v569 = vld [vmem:[%s531] sm:$0xff]
        %v570 = vld [vmem:[%s531 + $0x8] sm:$0xff]
        %v571 = vld [vmem:[%s531 + $0x10] sm:$0xff]
        %v572 = vld [vmem:[%s531 + $0x18] sm:$0xff]
        %v573 = vld [vmem:[%s539] sm:$0xff]
        %v574 = vld [vmem:[%s539 + $0x8] sm:$0xff]
        %v575 = vld [vmem:[%s539 + $0x10] sm:$0xff]
        %v576 = vld [vmem:[%s539 + $0x18] sm:$0xff]
        %v577 = vld [vmem:[%s547] sm:$0xff]
        %v578 = vld [vmem:[%s547 + $0x8] sm:$0xff]
        %v579 = vld [vmem:[%s547 + $0x10] sm:$0xff]
        %v580 = vld [vmem:[%s547 + $0x18] sm:$0xff]
        %v581 = vld [vmem:[%s554] sm:$0xff]
        %v582 = vld [vmem:[%s534] sm:$0x1]
        %v584 = vperm.slane %v582, 0
        %vm586 = vcmask 261120
        %v588 = vsel %vm586, %v563, 0
        %v591 = vsel %vm586, %v564, 0
        %593 = vmatpush.msra.mxu0 0.0
        %594 = vmatpush.msra.mxu0 0.0
        %595 = vmatpush.msra.mxu0 0.0
        %596 = vmatpush.msra.mxu0 0.0
        %597 = vmatpush.msra.mxu0 0.0
        %598 = vmatpush.msra.mxu0 0.0
        %599 = vmatpush.msra.mxu0 0.0
        %600 = vmatpush.msra.mxu0 0.0
        %601 = vmatpush.msra.mxu0 0.0
        %602 = vmatpush.msra.mxu0 0.0
        %603 = vmatpush.msra.mxu0 0.0
        %604 = vmatpush.msra.mxu0 0.0
        %605 = vmatpush.msra.mxu0 %v572
        %606 = vmatpush.msra.mxu0 %v571
        %607 = vmatpush.msra.mxu0 %v570
        %608 = vmatpush.msra.mxu0 %v569
        %609 = vmatmul.f32.gmra.mxu0 %v588
        %v610 = vpop.f32.mrf.mxu0
        %v611 = vadd.f32 %v584, %v610
        %612 = vmatmul.f32.gmra.mxu0 %v591
        %v613 = vpop.f32.mrf.mxu0
        %v614 = vadd.f32 %v584, %v613
        %615 = vdwg.mxu0
        %v616 = vld [vmem:[%s542] sm:$0x1]
        %v618 = vperm.slane %v616, 0
        %v621 = vsel %vm586, %v565, 0
        %v624 = vsel %vm586, %v566, 0
        %626 = vmatpush.msra.mxu0 0.0
        %627 = vmatpush.msra.mxu0 0.0
        %628 = vmatpush.msra.mxu0 0.0
        %629 = vmatpush.msra.mxu0 0.0
        %630 = vmatpush.msra.mxu0 0.0
        %631 = vmatpush.msra.mxu0 0.0
        %632 = vmatpush.msra.mxu0 0.0
        %633 = vmatpush.msra.mxu0 0.0
        %634 = vmatpush.msra.mxu0 0.0
        %635 = vmatpush.msra.mxu0 0.0
        %636 = vmatpush.msra.mxu0 0.0
        %637 = vmatpush.msra.mxu0 0.0
        %638 = vmatpush.msra.mxu0 %v576
        %639 = vmatpush.msra.mxu0 %v575
        %640 = vmatpush.msra.mxu0 %v574
        %641 = vmatpush.msra.mxu0 %v573
        %642 = vmatmul.f32.gmra.mxu0 %v621
        %v643 = vpop.f32.mrf.mxu0
        %v644 = vadd.f32 %v618, %v643
        %645 = vmatmul.f32.gmra.mxu0 %v624
        %v646 = vpop.f32.mrf.mxu0
        %v647 = vadd.f32 %v618, %v646
        %648 = vdwg.mxu0
        %v649 = vld [vmem:[%s550] sm:$0x1]
        %v651 = vperm.slane %v649, 0
        %v654 = vsel %vm586, %v567, 0
        %v657 = vsel %vm586, %v568, 0
        %659 = vmatpush.msra.mxu0 0.0
        %660 = vmatpush.msra.mxu0 0.0
        %661 = vmatpush.msra.mxu0 0.0
        %662 = vmatpush.msra.mxu0 0.0
        %663 = vmatpush.msra.mxu0 0.0
        %664 = vmatpush.msra.mxu0 0.0
        %665 = vmatpush.msra.mxu0 0.0
        %666 = vmatpush.msra.mxu0 0.0
        %667 = vmatpush.msra.mxu0 0.0
        %668 = vmatpush.msra.mxu0 0.0
        %669 = vmatpush.msra.mxu0 0.0
        %670 = vmatpush.msra.mxu0 0.0
        %671 = vmatpush.msra.mxu0 %v580
        %672 = vmatpush.msra.mxu0 %v579
        %673 = vmatpush.msra.mxu0 %v578
        %674 = vmatpush.msra.mxu0 %v577
        %675 = vmatmul.f32.gmra.mxu0 %v654
        %v676 = vpop.f32.mrf.mxu0
        %v677 = vadd.f32 %v651, %v676
        %678 = vmatmul.f32.gmra.mxu0 %v657
        %v679 = vpop.f32.mrf.mxu0
        %v680 = vadd.f32 %v651, %v679
        %681 = vdwg.mxu0
        %v682 = vmul.f32 %v611, 0.35355338
        %v683 = vmul.f32 %v614, 0.35355338
        %vm684 = vcmask 64512
        %v686 = vsel %vm684, %v682, 0
        %v689 = vsel %vm684, %v644, 0
        %691 = vmatpush.xpose.msra.mxu0 0.0
        %692 = vmatpush.xpose.msra.mxu0 0.0
        %693 = vmatpush.xpose.msra.mxu0 0.0
        %694 = vmatpush.xpose.msra.mxu0 0.0
        %695 = vmatpush.xpose.msra.mxu0 0.0
        %696 = vmatpush.xpose.msra.mxu0 0.0
        %697 = vmatpush.xpose.msra.mxu0 0.0
        %698 = vmatpush.xpose.msra.mxu0 0.0
        %699 = vmatpush.xpose.msra.mxu0 0.0
        %700 = vmatpush.xpose.msra.mxu0 0.0
        %701 = vmatpush.xpose.msra.mxu0 0.0
        %702 = vmatpush.xpose.msra.mxu0 0.0
        %703 = vmatpush.xpose.msra.mxu0 0.0
        %704 = vmatpush.xpose.msra.mxu0 0.0
        %705 = vmatpush.xpose.msra.mxu0 0.0
        %706 = vmatpush.xpose.msra.mxu0 %v689
        %707 = vmatmul.f32.gmra.mxu0 %v686
        %v708 = vpop.f32.mrf.mxu0
        %v709 = vadd.f32 0.0, %v708
        %710 = vdwg.mxu0
        %v712 = vsel %vm684, %v683, 0
        %v715 = vsel %vm684, %v647, 0
        %717 = vmatpush.xpose.msra.mxu0 0.0
        %718 = vmatpush.xpose.msra.mxu0 0.0
        %719 = vmatpush.xpose.msra.mxu0 0.0
        %720 = vmatpush.xpose.msra.mxu0 0.0
        %721 = vmatpush.xpose.msra.mxu0 0.0
        %722 = vmatpush.xpose.msra.mxu0 0.0
        %723 = vmatpush.xpose.msra.mxu0 0.0
        %724 = vmatpush.xpose.msra.mxu0 0.0
        %725 = vmatpush.xpose.msra.mxu0 0.0
        %726 = vmatpush.xpose.msra.mxu0 0.0
        %727 = vmatpush.xpose.msra.mxu0 0.0
        %728 = vmatpush.xpose.msra.mxu0 0.0
        %729 = vmatpush.xpose.msra.mxu0 0.0
        %730 = vmatpush.xpose.msra.mxu0 0.0
        %731 = vmatpush.xpose.msra.mxu0 0.0
        %732 = vmatpush.xpose.msra.mxu0 %v715
        %733 = vmatmul.f32.gmra.mxu0 %v712
        %v734 = vpop.f32.mrf.mxu0
        %v735 = vadd.f32 0.0, %v734
        %736 = vdwg.mxu0
        %v737 = vsel %vm684, %v709, -inf
        %738 = vmax.xlane.f32.xlu0 %v737
        %v739 = vpop.xlane.xlu0 %738
        %v740 = vsel %vm684, %v735, -inf
        %741 = vmax.xlane.f32.xlu0 %v740
        %v742 = vpop.xlane.xlu0 %741
        %v743 = vsub.f32 %v709, %v739
        %v744 = vsub.f32 %v735, %v742
        %v745 = vmul.f32 %v743, 1.442695
        %v746 = vpow.pop %v745
        %v747 = vmul.f32 %v744, 1.442695
        %v748 = vpow.pop %v747
        %v749 = vsel %vm684, %v746, 0.0
        %750 = vadd.xlane.f32.xlu0 %v749
        %v751 = vpop.xlane.xlu0 %750
        %v752 = vsel %vm684, %v748, 0.0
        %753 = vadd.xlane.f32.xlu0 %v752
        %v754 = vpop.xlane.xlu0 %753
        %v755 = vrcp.pop %v751
        %v756 = vrcp.pop %v754
        %v757 = vmul.f32 %v746, %v755
        %v758 = vmul.f32 %v748, %v756
        %v760 = vsel %vm684, %v757, 0
        %762 = vmatpush.msra.mxu0 0.0
        %763 = vmatpush.msra.mxu0 0.0
        %764 = vmatpush.msra.mxu0 0.0
        %765 = vmatpush.msra.mxu0 0.0
        %766 = vmatpush.msra.mxu0 0.0
        %767 = vmatpush.msra.mxu0 0.0
        %768 = vmatpush.msra.mxu0 0.0
        %769 = vmatpush.msra.mxu0 0.0
        %770 = vmatpush.msra.mxu0 0.0
        %771 = vmatpush.msra.mxu0 0.0
        %772 = vmatpush.msra.mxu0 0.0
        %773 = vmatpush.msra.mxu0 0.0
        %774 = vmatpush.msra.mxu0 0.0
        %775 = vmatpush.msra.mxu0 0.0
        %776 = vmatpush.msra.mxu0 0.0
        %777 = vmatpush.msra.mxu0 %v677
        %778 = vmatmul.f32.gmra.mxu0 %v760
        %v779 = vpop.f32.mrf.mxu0
        %v780 = vadd.f32 0.0, %v779
        %781 = vdwg.mxu0
        %v783 = vsel %vm684, %v758, 0
        %785 = vmatpush.msra.mxu0 0.0
        %786 = vmatpush.msra.mxu0 0.0
        %787 = vmatpush.msra.mxu0 0.0
        %788 = vmatpush.msra.mxu0 0.0
        %789 = vmatpush.msra.mxu0 0.0
        %790 = vmatpush.msra.mxu0 0.0
        %791 = vmatpush.msra.mxu0 0.0
        %792 = vmatpush.msra.mxu0 0.0
        %793 = vmatpush.msra.mxu0 0.0
        %794 = vmatpush.msra.mxu0 0.0
        %795 = vmatpush.msra.mxu0 0.0
        %796 = vmatpush.msra.mxu0 0.0
        %797 = vmatpush.msra.mxu0 0.0
        %798 = vmatpush.msra.mxu0 0.0
        %799 = vmatpush.msra.mxu0 0.0
        %800 = vmatpush.msra.mxu0 %v680
        %801 = vmatmul.f32.gmra.mxu0 %v783
        %v802 = vpop.f32.mrf.mxu0
        %v803 = vadd.f32 0.0, %v802
        %804 = vdwg.mxu0
        %v805 = vld [vmem:[#allocation2] sm:$0xff]
        %v806 = vld [vmem:[#allocation2 + $0x8] sm:$0xff]
        %v808 = vsel %vm684, %v780, 0
        %v811 = vsel %vm684, %v803, 0
        %813 = vmatpush.msra.mxu0 0.0
        %814 = vmatpush.msra.mxu0 0.0
        %815 = vmatpush.msra.mxu0 0.0
        %816 = vmatpush.msra.mxu0 0.0
        %817 = vmatpush.msra.mxu0 0.0
        %818 = vmatpush.msra.mxu0 0.0
        %819 = vmatpush.msra.mxu0 0.0
        %820 = vmatpush.msra.mxu0 0.0
        %821 = vmatpush.msra.mxu0 0.0
        %822 = vmatpush.msra.mxu0 0.0
        %823 = vmatpush.msra.mxu0 0.0
        %824 = vmatpush.msra.mxu0 0.0
        %825 = vmatpush.msra.mxu0 0.0
        %826 = vmatpush.msra.mxu0 0.0
        %827 = vmatpush.msra.mxu0 0.0
        %828 = vmatpush.msra.mxu0 %v581
        %829 = vmatmul.f32.gmra.mxu0 %v808
        %v830 = vpop.f32.mrf.mxu0
        %v831 = vadd.f32 0.0, %v830
        %832 = vmatmul.f32.gmra.mxu0 %v811
        %v833 = vpop.f32.mrf.mxu0
        %v834 = vadd.f32 0.0, %v833
        %835 = vdwg.mxu0
        %v836 = vadd.f32 %v805, %v831
        %v837 = vadd.f32 %v806, %v834
        %838 = vst.msk [vmem:[#allocation2] sm:$0xff] %vm586, %v836
        %839 = vst.msk [vmem:[#allocation2 + $0x8] sm:$0xff] %vm586, %v837
        %p840 = scmp.eq.s32.totalorder %s28, 3
        // Predicated region
        $region69: #{tpu_custom_call.1} parent=63 // pred_check
          %p841 = pneg %p840
        $region70: #{tpu_custom_call.1} parent=63 // pred_check_branch
          %843 = sbr.rel (%p841) target = $region72
        $region71: #{tpu_custom_call.1} parent=63 // pred_region
          %v844 = vld [vmem:[#allocation2] sm:$0xff]
          %v845 = vld [vmem:[#allocation2 + $0x8] sm:$0xff]
          %v846 = vld [vmem:[%s10] sm:$0x1]
          %v848 = vperm.slane %v846, 0
          %v850 = vadd.f32 %v844, %v848
          %v851 = vadd.f32 %v845, %v848
          %852 = vst.msk [vmem:[#allocation3] sm:$0xff] %vm586, %v850
          %853 = vst.msk [vmem:[#allocation3 + $0x8] sm:$0xff] %vm586, %v851
        $region72: #{tpu_custom_call.1} parent=63 // pred_fallthru
          _
        // Predicated region
        $region73: #{tpu_custom_call.1} parent=63 // pred_check
          %p854 = pneg %p334
        $region74: #{tpu_custom_call.1} parent=63 // pred_check_branch
          %856 = sbr.rel (%p854) target = $region76
        $region75: #{tpu_custom_call.1} parent=63 // pred_region
          %s857 = smul.u32 2, %s27
          %859 = vsyncadd [#allocation4], 0
          %s860 = smul.addr %s857, 8
          %s861 = scalar_lea.hbm %s11, %s860
          %s862 = sshll.u32 [#allocation3], 4
          %s863 = int_to_ptr.vmem [resolvable:$true] %s862
          %s864 = sshll.u32 %s861, 4
          %s865 = int_to_ptr.hbm [resolvable:$true] %s864
          %870 = dma.vmem_to_hbm [thread:$0]  %s863, 256, %s865, [#allocation4], 128, 128, 8
        $region76: #{tpu_custom_call.1} parent=63 // pred_fallthru
          _
        // Predicated region
        $region77: #{tpu_custom_call.1} parent=63 // pred_check
          %p871 = pneg %p334
        $region78: #{tpu_custom_call.1} parent=63 // pred_check_branch
          %873 = sbr.rel (%p871) target = $region80
        $region79: #{tpu_custom_call.1} parent=63 // pred_region
          %875 = dma.done [#allocation4], 256
        $region80: #{tpu_custom_call.1} parent=63 // pred_fallthru
          _
      $region64: #{tpu_custom_call.1} parent=5 // pred_fallthru
        _
      %p876 = scmp.le.s32.totalorder 2, %s18
      // Predicated region
      $region81: #{tpu_custom_call.1} parent=5 // pred_check
        %p877 = pneg %p876
      $region82: #{tpu_custom_call.1} parent=5 // pred_check_branch
        %879 = sbr.rel (%p877) target = $region84
      $region83: #{tpu_custom_call.1} parent=5 // pred_region
        %s880 = ssub.s32 %s18, 2
      $region84: #{tpu_custom_call.1} parent=5 // pred_fallthru
        _
    $region6: #{tpu_custom_call.1} parent=1 // loop_footer
      %s22 = sadd.s32 1, %s18
    $region7: #{tpu_custom_call.1} parent=1 // loop_footer_branch
      %17 = sbr.rel target = $region3
    $region8: #{tpu_custom_call.1} parent=1 // loop_exit
      _
    %881 = vsyncpa [#allocation4], 1
    %s882 = scalar_lea.sflag [#allocation4], 1
    %883 = vsyncpa %s882, 1

</llo_original>
